<compile_context>
chip_gen: v6e
topology: v6e:2x2x1
jax: 0.10.0
libtpu: 0.0.40
codegen_flags: <defaults>
</compile_context>

<pallas_src>
import functools

import jax
import jax.numpy as jnp
from jax import lax
from jax.experimental import pallas as pl
from jax.experimental.pallas import tpu as pltpu


def _round_up(x, m):
    return (x + m - 1) // m * m


# ----------------------------- Pallas kernel --------------------------------
def _tagger_fused_kernel(feat_ref, wfold_ref, w2_ref, b2_ref, out_ref, *,
                         col_offsets, mxu_dtype):
    """Fused: multi-hot gather+Linear1 (folded, single K=512 matmul) -> ReLU
    -> Linear2."""
    feats = feat_ref[...]                       # (TB, n_pos) int32
    k_total = wfold_ref.shape[0]
    k_iota = lax.broadcasted_iota(jnp.int32, (1, k_total), 1)

    # Multi-hot over disjoint 128-wide segments (one hit per position).
    # Segment offsets are static -> folded into the iota constant.
    hot = feats[:, 0:1] == (k_iota - col_offsets[0])
    for p in range(1, feats.shape[1]):          # static unroll (n_pos small)
        hot = jnp.logical_or(hot, feats[:, p:p + 1] == (k_iota - col_offsets[p]))
    oh = hot.astype(mxu_dtype)                  # (TB, K) exact in bf16/f32

    # hidden = multi_hot @ stacked_folded_tables   (b1 already folded in)
    h = jnp.dot(oh, wfold_ref[...].astype(mxu_dtype),
                preferred_element_type=jnp.float32)        # (TB, H_pad)
    h = jnp.maximum(h, 0.0)                                # ReLU

    o = jnp.dot(h.astype(mxu_dtype), w2_ref[...].astype(mxu_dtype),
                preferred_element_type=jnp.float32)        # (TB, O_pad)
    out_ref[...] = (o + b2_ref[...]).astype(out_ref.dtype)


# ------------------------------ Wrapper --------------------------------------
def tagger_forward(features, wfold, w2, b2, *, col_offsets, output_dim,
                   block_b=None, mxu_dtype=jnp.float32):
    """features: (B, n_pos) int32 (word indices then the tag index).

    wfold: (K_total, H_pad) stacked folded embedding*W1 tables (bias folded).
    w2: (H_pad, O_pad), b2: (1, O_pad).  Returns (B, output_dim) float32.
    """
    batch, n_pos = features.shape
    k_total, h_pad = wfold.shape
    o_pad = w2.shape[1]

    if block_b is None:
        b_ceil = _round_up(max(batch, 8), 8)
        target = 1024
        if b_ceil <= 16:
            block_b = b_ceil                       # tiny batch: single step
        elif b_ceil <= 2 * target:
            # >=2 grid steps so v7x's two TensorCores both get work.
            block_b = _round_up((b_ceil + 1) // 2, 8)
        else:
            block_b = target                       # large batch: grid >= 2

    b_pad = _round_up(batch, block_b)
    if b_pad != batch:
        # Padded rows select index 0 of every segment; sliced off below.
        features = jnp.pad(features, ((0, b_pad - batch), (0, 0)))

    grid = (b_pad // block_b,)

    kernel = functools.partial(_tagger_fused_kernel,
                               col_offsets=tuple(col_offsets),
                               mxu_dtype=mxu_dtype)

    flops = 2 * b_pad * (k_total * h_pad + h_pad * o_pad)
    bytes_accessed = 4 * (features.size + wfold.size + w2.size + b2.size
                          + b_pad * o_pad)

    out = pl.pallas_call(
        kernel,
        out_shape=jax.ShapeDtypeStruct((b_pad, o_pad), jnp.float32),
        grid=grid,
        in_specs=[
            pl.BlockSpec((block_b, n_pos), lambda i: (i, 0)),   # features
            pl.BlockSpec(wfold.shape, lambda i: (0, 0)),        # folded tables
            pl.BlockSpec(w2.shape, lambda i: (0, 0)),           # w2
            pl.BlockSpec(b2.shape, lambda i: (0, 0)),           # b2
        ],
        out_specs=pl.BlockSpec((block_b, o_pad), lambda i: (i, 0)),
        compiler_params=pltpu.CompilerParams(
            dimension_semantics=("parallel",),
            vmem_limit_bytes=32 * 1024 * 1024),
        cost_estimate=pl.CostEstimate(flops=flops, transcendentals=0,
                                      bytes_accessed=bytes_accessed),
    )(features, wfold, w2, b2)

    # TODO(synk): if HBM writeback ever dominates at huge batch, return the
    # padded (B, 128) buffer directly instead of this extra slicing pass.
    return out[:batch, :output_dim]


# --------------------------- Model (parameters) -------------------------------
class FixedWindowTaggerModelPallas:
    """JAX/Pallas re-implementation of FixedWindowTaggerModel.forward."""

    def __init__(self, embedding_specs, hidden_dim, output_dim, key):
        (n_words, vocab_size, word_dim) = embedding_specs[0]
        (n_tags, tags_size, tag_dim) = embedding_specs[1]
        assert n_tags == 1, "forward() only consumes a single tag column"
        self.n_words, self.word_dim = n_words, word_dim
        self.n_tags, self.tag_dim = n_tags, tag_dim
        self.hidden_dim, self.output_dim = hidden_dim, output_dim

        k_we, k_te, k_w1, k_b1, k_w2, k_b2 = jax.random.split(key, 6)

        # nn.Embedding(padding_idx=0): row 0 is zeros.
        word_embs = jax.random.normal(k_we, (vocab_size, word_dim), jnp.float32)
        word_embs = word_embs.at[0].set(0.0)
        tag_embs = jax.random.normal(k_te, (tags_size, tag_dim), jnp.float32)
        tag_embs = tag_embs.at[0].set(0.0)
        self.word_embs, self.tag_embs = word_embs, tag_embs

        d_in = n_words * word_dim + n_tags * tag_dim
        w1 = 0.1 * jax.random.normal(k_w1, (d_in, hidden_dim), jnp.float32)
        b1 = 0.1 * jax.random.normal(k_b1, (hidden_dim,), jnp.float32)
        w2 = 0.1 * jax.random.normal(k_w2, (hidden_dim, output_dim), jnp.float32)
        b2 = 0.1 * jax.random.normal(k_b2, (output_dim,), jnp.float32)
        self.w1, self.b1, self.w2, self.b2 = w1, b1, w2, b2

        # ---- Folded, lane-dense kernel layouts --------------------------------
        v_pad = _round_up(vocab_size, 128)      # lane dim of the one-hot
        t_pad = _round_up(tags_size, 128)
        h_pad = _round_up(hidden_dim, 128)
        o_pad = _round_up(output_dim, 128)
        n_pos = n_words + 1
        bias_share = b1 / float(n_pos)          # exactly one row selected/segment

        folded = []
        offsets = []
        off = 0
        for p in range(n_words):
            rows = w1[p * word_dim:(p + 1) * word_dim, :]        # (wd, H)
            core = word_embs @ rows + bias_share[None, :]        # (V, H)
            blk = jnp.zeros((v_pad, h_pad), jnp.float32)
            blk = blk.at[:vocab_size, :hidden_dim].set(core)
            folded.append(blk)
            offsets.append(off)
            off += v_pad
        rows_t = w1[n_words * word_dim:, :]                      # (td, H)
        core_t = tag_embs @ rows_t + bias_share[None, :]         # (T, H)
        blk_t = jnp.zeros((t_pad, h_pad), jnp.float32)
        blk_t = blk_t.at[:tags_size, :hidden_dim].set(core_t)
        folded.append(blk_t)
        offsets.append(off)

        self.wfold = jnp.concatenate(folded, axis=0)             # (K_total, H_pad)
        self.col_offsets = tuple(offsets)
        self.w2_p = jnp.zeros((h_pad, o_pad),
                              jnp.float32).at[:hidden_dim, :output_dim].set(w2)
        self.b2_p = jnp.zeros((1, o_pad), jnp.float32).at[0, :output_dim].set(b2)

    def __call__(self, features, mxu_dtype=jnp.float32):
        # features: (B, n_words + 1) int32; last column is the tag index.
        return tagger_forward(features, self.wfold, self.w2_p, self.b2_p,
                              col_offsets=self.col_offsets,
                              output_dim=self.output_dim,
                              mxu_dtype=mxu_dtype)


def _reference_forward(model, features):
    """Pure-JAX reference of the same forward (for correctness check)."""
    batch_size = features.shape[0]
    words = features[:, :-1]
    tags = features[:, -1]
    word_e = jnp.take(model.word_embs, words, axis=0)
    tag_e = jnp.take(model.tag_embs, tags, axis=0)
    x = jnp.concatenate([word_e.reshape(batch_size, -1), tag_e], axis=1)
    h = jnp.maximum(x @ model.w1 + model.b1[None, :], 0.0)
    return h @ model.w2 + model.b2[None, :]


# ------------------------------- Demo ----------------------------------------
if __name__ == "__main__":
    key = jax.random.PRNGKey(0)
    k_params, k_feat = jax.random.split(key)

    # Small, module-consistent shapes:
    n_words, vocab_size, word_dim = 3, 50, 32
    n_tags, tags_size, tag_dim = 1, 10, 16
    hidden_dim, output_dim = 64, 12

    embedding_specs = [(n_words, vocab_size, word_dim),
                       (n_tags, tags_size, tag_dim)]
    model = FixedWindowTaggerModelPallas(embedding_specs, hidden_dim,
                                         output_dim, k_params)

    for batch in (8, 37):   # 37 exercises batch padding + a 2-step grid
        k_w, k_t = jax.random.split(jax.random.fold_in(k_feat, batch))
        word_ids = jax.random.randint(k_w, (batch, n_words), 0, vocab_size,
                                      jnp.int32)
        tag_ids = jax.random.randint(k_t, (batch, 1), 0, tags_size, jnp.int32)
        features = jnp.concatenate([word_ids, tag_ids], axis=1)

        out = jax.block_until_ready(model(features))
        ref = jax.block_until_ready(_reference_forward(model, features))

        assert out.shape == (batch, output_dim)
        assert jnp.allclose(out, ref, atol=1e-4, rtol=1e-4)

    print("KERNEL_OK")
</pallas_src>

<mosaic_0001>
module attributes {stable_mosaic.version = 11 : i64} {
  func.func @_tagger_fused_kernel(%arg0: i32, %arg1: memref<8x4xi32, #tpu.memory_space<vmem>>, %arg2: memref<512x128xf32, #tpu.memory_space<vmem>>, %arg3: memref<128x128xf32, #tpu.memory_space<vmem>>, %arg4: memref<1x128xf32, #tpu.memory_space<vmem>>, %arg5: memref<8x128xf32, #tpu.memory_space<vmem>>) attributes {dimension_semantics = [#tpu.dimension_semantics<parallel>], iteration_bounds = array<i64: 1>, scalar_prefetch = 0 : i64, scratch_operands = 0 : i64, tpu.core_type = #tpu.core_type<tc>, window_params = [{transform_indices = @transform_0, window_bounds = array<i64: 8, 4>}, {pipeline_mode = #tpu.pipeline_mode<synchronous>, transform_indices = @transform_1, window_bounds = array<i64: 512, 128>}, {pipeline_mode = #tpu.pipeline_mode<synchronous>, transform_indices = @transform_2, window_bounds = array<i64: 128, 128>}, {pipeline_mode = #tpu.pipeline_mode<synchronous>, transform_indices = @transform_3, window_bounds = array<i64: 1, 128>}, {transform_indices = @transform_4, window_bounds = array<i64: 8, 128>}]} {
    %c0 = arith.constant 0 : index
    %c0_0 = arith.constant 0 : index
    %0 = vector.load %arg1[%c0, %c0_0] : memref<8x4xi32, #tpu.memory_space<vmem>>, vector<8x4xi32>
    %1 = tpu.iota {dimensions = array<i32: 1>} : vector<1x512xi32>
    %2 = vector.extract_strided_slice %0 {offsets = [0, 0], sizes = [8, 1], strides = [1, 1]} : vector<8x4xi32> to vector<8x1xi32>
    %c0_i32 = arith.constant 0 : i32
    %3 = vector.broadcast %c0_i32 : i32 to vector<1x512xi32>
    %4 = arith.subi %1, %3 : vector<1x512xi32>
    %5 = vector.broadcast %2 : vector<8x1xi32> to vector<8x512xi32>
    %6 = vector.broadcast %4 : vector<1x512xi32> to vector<8x512xi32>
    %7 = arith.cmpi eq, %5, %6 : vector<8x512xi32>
    %8 = vector.extract_strided_slice %0 {offsets = [0, 1], sizes = [8, 1], strides = [1, 1]} : vector<8x4xi32> to vector<8x1xi32>
    %c128_i32 = arith.constant 128 : i32
    %9 = vector.broadcast %c128_i32 : i32 to vector<1x512xi32>
    %10 = arith.subi %1, %9 : vector<1x512xi32>
    %11 = vector.broadcast %8 : vector<8x1xi32> to vector<8x512xi32>
    %12 = vector.broadcast %10 : vector<1x512xi32> to vector<8x512xi32>
    %13 = arith.cmpi eq, %11, %12 : vector<8x512xi32>
    %14 = arith.ori %7, %13 : vector<8x512xi1>
    %15 = vector.extract_strided_slice %0 {offsets = [0, 2], sizes = [8, 1], strides = [1, 1]} : vector<8x4xi32> to vector<8x1xi32>
    %c256_i32 = arith.constant 256 : i32
    %16 = vector.broadcast %c256_i32 : i32 to vector<1x512xi32>
    %17 = arith.subi %1, %16 : vector<1x512xi32>
    %18 = vector.broadcast %15 : vector<8x1xi32> to vector<8x512xi32>
    %19 = vector.broadcast %17 : vector<1x512xi32> to vector<8x512xi32>
    %20 = arith.cmpi eq, %18, %19 : vector<8x512xi32>
    %21 = arith.ori %14, %20 : vector<8x512xi1>
    %22 = vector.extract_strided_slice %0 {offsets = [0, 3], sizes = [8, 1], strides = [1, 1]} : vector<8x4xi32> to vector<8x1xi32>
    %c384_i32 = arith.constant 384 : i32
    %23 = vector.broadcast %c384_i32 : i32 to vector<1x512xi32>
    %24 = arith.subi %1, %23 : vector<1x512xi32>
    %25 = vector.broadcast %22 : vector<8x1xi32> to vector<8x512xi32>
    %26 = vector.broadcast %24 : vector<1x512xi32> to vector<8x512xi32>
    %27 = arith.cmpi eq, %25, %26 : vector<8x512xi32>
    %28 = arith.ori %21, %27 : vector<8x512xi1>
    %29 = arith.extui %28 : vector<8x512xi1> to vector<8x512xi32>
    %30 = arith.sitofp %29 : vector<8x512xi32> to vector<8x512xf32>
    %c0_1 = arith.constant 0 : index
    %c0_2 = arith.constant 0 : index
    %31 = vector.load %arg2[%c0_1, %c0_2] : memref<512x128xf32, #tpu.memory_space<vmem>>, vector<512x128xf32>
    %cst = arith.constant dense<0.000000e+00> : vector<8x128xf32>
    %32 = tpu.matmul %30, %31, %cst {dimension_numbers = #tpu.dot_dimension_numbers<[1], [0], [0], [1], [0, 0, 1, 1], [], []>} : vector<8x512xf32>, vector<512x128xf32>, vector<8x128xf32> -> vector<8x128xf32>
    %cst_3 = arith.constant 0.000000e+00 : f32
    %33 = vector.broadcast %cst_3 : f32 to vector<8x128xf32>
    %34 = arith.maximumf %32, %33 : vector<8x128xf32>
    %c0_4 = arith.constant 0 : index
    %c0_5 = arith.constant 0 : index
    %35 = vector.load %arg3[%c0_4, %c0_5] : memref<128x128xf32, #tpu.memory_space<vmem>>, vector<128x128xf32>
    %cst_6 = arith.constant dense<0.000000e+00> : vector<8x128xf32>
    %36 = tpu.matmul %34, %35, %cst_6 {dimension_numbers = #tpu.dot_dimension_numbers<[1], [0], [0], [1], [0, 0, 1, 1], [], []>} : vector<8x128xf32>, vector<128x128xf32>, vector<8x128xf32> -> vector<8x128xf32>
    %c0_7 = arith.constant 0 : index
    %c0_8 = arith.constant 0 : index
    %37 = vector.load %arg4[%c0_7, %c0_8] : memref<1x128xf32, #tpu.memory_space<vmem>>, vector<1x128xf32>
    %38 = vector.broadcast %37 : vector<1x128xf32> to vector<8x128xf32>
    %39 = arith.addf %36, %38 : vector<8x128xf32>
    %c0_9 = arith.constant 0 : index
    %c0_10 = arith.constant 0 : index
    %40 = vector.load %arg5[%c0_9, %c0_10] : memref<8x128xf32, #tpu.memory_space<vmem>>, vector<8x128xf32>
    tpu.vector_store %arg5[%c0_9, %c0_10], %39 {strides = array<i32>} : memref<8x128xf32, #tpu.memory_space<vmem>>, vector<8x128xf32>,
    return
  }
  func.func @transform_0(%arg0: i32) -> (i32, i32) {
    %c0_i32 = arith.constant 0 : i32
    %c0_i32_0 = arith.constant 0 : i32
    return %arg0, %c0_i32 : i32, i32
  }
  func.func @transform_1(%arg0: i32) -> (i32, i32) {
    %c0_i32 = arith.constant 0 : i32
    %c0_i32_0 = arith.constant 0 : i32
    %c0_i32_1 = arith.constant 0 : i32
    return %c0_i32, %c0_i32_0 : i32, i32
  }
  func.func @transform_2(%arg0: i32) -> (i32, i32) {
    %c0_i32 = arith.constant 0 : i32
    %c0_i32_0 = arith.constant 0 : i32
    %c0_i32_1 = arith.constant 0 : i32
    return %c0_i32, %c0_i32_0 : i32, i32
  }
  func.func @transform_3(%arg0: i32) -> (i32, i32) {
    %c0_i32 = arith.constant 0 : i32
    %c0_i32_0 = arith.constant 0 : i32
    %c0_i32_1 = arith.constant 0 : i32
    return %c0_i32, %c0_i32_0 : i32, i32
  }
  func.func @transform_4(%arg0: i32) -> (i32, i32) {
    %c0_i32 = arith.constant 0 : i32
    %c0_i32_0 = arith.constant 0 : i32
    return %arg0, %c0_i32 : i32, i32
  }
}

</mosaic_0001>

<llo_original>
// kernel: tpu_custom_call.1
$region0: #{tpu_custom_call.1}
  #allocation0 [shape = 'u32[]', space=smem, size = 0x4, offset = 0x4, fixed_abs, tag = 'smem constant byte address 0x4 - core index']
  #allocation1 [shape = 'u32[144,128]{1,0:T(1,128)}', space=vmem, size = 0x12000, scoped, tag = 'internal scratch']
  %s0 = inlined_call_operand.vmem [shape: s32[8,4], index: 0, kind: input, shape index: {}]
  %s1 = inlined_call_operand.hbm [shape: f32[512,128], index: 1, kind: input, shape index: {}]
  %s2 = inlined_call_operand.hbm [shape: f32[128,128], index: 2, kind: input, shape index: {}]
  %s3 = inlined_call_operand.vmem [shape: f32[1,128], index: 3, kind: input, shape index: {}]
  %s4 = inlined_call_operand.hbm [shape: f32[8,128], index: 4, kind: output, shape index: {}]
  %s5 = sld [smem:[#allocation0]]
  $region34: #{tpu_custom_call.1} parent=0
    _
  %s7 = ssub.s32 1, %s5
  %s8 = scalar_select 0, %s7, %s5
  $region1: #{tpu_custom_call.1} parent=0
    #allocation2 [shape = 'u8[262144]{0}', space=vmem, size = 0x40000, scoped, tag = 'input window, operand 1, single buffered']
    #allocation3 [shape = 's32[1]{0}', space=sflag, size = 0x4, scoped, tag = 'scoped memory for tpu_custom_call.1']
    #allocation4 [shape = 's32[1]{0}', space=sflag, size = 0x4, scoped, tag = 'scoped memory for tpu_custom_call.1']
    #allocation5 [shape = 'u8[65536]{0}', space=vmem, size = 0x10000, scoped, tag = 'input window, operand 2, single buffered']
    #allocation6 [shape = 's32[1]{0}', space=sflag, size = 0x4, scoped, tag = 'scoped memory for tpu_custom_call.1']
    #allocation7 [shape = 'u8[4096]{0}', space=vmem, size = 0x1000, scoped, tag = 'output window, operand 0, single buffered']
    %9 = vsyncpa [#allocation3], 0
    %10 = vsyncpa [#allocation6], 0
    %11 = vsyncpa [#allocation4], 0
    // Predicated region
    $region2: #{tpu_custom_call.1} parent=1 // pred_check
      _
    $region3: #{tpu_custom_call.1} parent=1 // pred_check_branch
      %13 = sbr.rel (0) target = $region5
    $region4: #{tpu_custom_call.1} parent=1 // pred_region
      _
    $region5: #{tpu_custom_call.1} parent=1 // pred_fallthru
      _
    // Predicated region
    $region6: #{tpu_custom_call.1} parent=1 // pred_check
      _
    $region7: #{tpu_custom_call.1} parent=1 // pred_check_branch
      %15 = sbr.rel (0) target = $region9
    $region8: #{tpu_custom_call.1} parent=1 // pred_region
      %s17 = ssub.s32 8192, 8192
      %18 = vsyncadd [#allocation3], %s17
      %s19 = sshll.u32 [#allocation2], 4
      %s20 = int_to_ptr.vmem [resolvable:$true] %s19
      %25 = dma.hbm_to_vmem [thread:$0]  %s1, 8192, %s20, [#allocation3], 128, 128, 8
    $region9: #{tpu_custom_call.1} parent=1 // pred_fallthru
      _
    // Predicated region
    $region10: #{tpu_custom_call.1} parent=1 // pred_check
      _
    $region11: #{tpu_custom_call.1} parent=1 // pred_check_branch
      %27 = sbr.rel (0) target = $region13
    $region12: #{tpu_custom_call.1} parent=1 // pred_region
      %s29 = ssub.s32 2048, 2048
      %30 = vsyncadd [#allocation6], %s29
      %s31 = sshll.u32 [#allocation5], 4
      %s32 = int_to_ptr.vmem [resolvable:$true] %s31
      %37 = dma.hbm_to_vmem [thread:$0]  %s2, 2048, %s32, [#allocation6], 128, 128, 8
    $region13: #{tpu_custom_call.1} parent=1 // pred_fallthru
      _
    // Predicated region
    $region14: #{tpu_custom_call.1} parent=1 // pred_check
      _
    $region15: #{tpu_custom_call.1} parent=1 // pred_check_branch
      %39 = sbr.rel (0) target = $region17
    $region16: #{tpu_custom_call.1} parent=1 // pred_region
      _
    $region17: #{tpu_custom_call.1} parent=1 // pred_fallthru
      _
    // Predicated region
    $region18: #{tpu_custom_call.1} parent=1 // pred_check
      _
    $region19: #{tpu_custom_call.1} parent=1 // pred_check_branch
      %41 = sbr.rel (0) target = $region21
    $region20: #{tpu_custom_call.1} parent=1 // pred_region
      %42 = dma.done [#allocation3], 8192
    $region21: #{tpu_custom_call.1} parent=1 // pred_fallthru
      _
    // Predicated region
    $region22: #{tpu_custom_call.1} parent=1 // pred_check
      _
    $region23: #{tpu_custom_call.1} parent=1 // pred_check_branch
      %44 = sbr.rel (0) target = $region25
    $region24: #{tpu_custom_call.1} parent=1 // pred_region
      %45 = dma.done [#allocation6], 2048
    $region25: #{tpu_custom_call.1} parent=1 // pred_fallthru
      _
    %v46 = vld [vmem:[%s0] sm:$0xff]
    %v47 = vlaneseq
    %v48 = vand.u32 %v47, 127
    %v49 = vadd.s32 %v48, 128
    %v50 = vadd.s32 %v48, 256
    %v51 = vadd.s32 %v48, 384
    %52 = vset.pattern.permute.xlu0 0
    %53 = vperm.xlu0 %52, %v46
    %v54 = vpop.permute.xlu0 %53
    %vm55 = vcmp.eq.s32.totalorder %v54, %v48
    %vm56 = vcmp.eq.s32.totalorder %v54, %v49
    %vm57 = vcmp.eq.s32.totalorder %v54, %v50
    %vm58 = vcmp.eq.s32.totalorder %v54, %v51
    %v59 = vsub.s32 %v48, 128
    %v60 = vsub.s32 %v50, 128
    %v61 = vsub.s32 %v51, 128
    %62 = vset.pattern.permute.xlu0 1
    %63 = vperm.xlu0 %62, %v46
    %v64 = vpop.permute.xlu0 %63
    %vm65 = vcmp.eq.s32.totalorder %v64, %v59
    %vm66 = vcmp.eq.s32.totalorder %v64, %v48
    %vm67 = vcmp.eq.s32.totalorder %v64, %v60
    %vm68 = vcmp.eq.s32.totalorder %v64, %v61
    %vm69 = vmor %vm55, %vm65
    %vm70 = vmor %vm56, %vm66
    %vm71 = vmor %vm57, %vm67
    %vm72 = vmor %vm58, %vm68
    %v73 = vsub.s32 %v48, 256
    %v74 = vsub.s32 %v49, 256
    %v75 = vsub.s32 %v51, 256
    %76 = vset.pattern.permute.xlu0 2
    %77 = vperm.xlu0 %76, %v46
    %v78 = vpop.permute.xlu0 %77
    %vm79 = vcmp.eq.s32.totalorder %v78, %v73
    %vm80 = vcmp.eq.s32.totalorder %v78, %v74
    %vm81 = vcmp.eq.s32.totalorder %v78, %v48
    %vm82 = vcmp.eq.s32.totalorder %v78, %v75
    %vm83 = vmor %vm69, %vm79
    %vm84 = vmor %vm70, %vm80
    %vm85 = vmor %vm71, %vm81
    %vm86 = vmor %vm72, %vm82
    %v87 = vsub.s32 %v48, 384
    %v88 = vsub.s32 %v49, 384
    %v89 = vsub.s32 %v50, 384
    %90 = vset.pattern.permute.xlu0 3
    %91 = vperm.xlu0 %90, %v46
    %v92 = vpop.permute.xlu0 %91
    %vm93 = vcmp.eq.s32.totalorder %v92, %v87
    %vm94 = vcmp.eq.s32.totalorder %v92, %v88
    %vm95 = vcmp.eq.s32.totalorder %v92, %v89
    %vm96 = vcmp.eq.s32.totalorder %v92, %v48
    %vm97 = vmor %vm83, %vm93
    %vm98 = vmor %vm84, %vm94
    %vm99 = vmor %vm85, %vm95
    %vm100 = vmor %vm86, %vm96
    %v101 = vsel %vm97, 1, 0
    %v102 = vsel %vm98, 1, 0
    %v103 = vsel %vm99, 1, 0
    %v104 = vsel %vm100, 1, 0
    %v105 = vcvt.s32.f32 %v101
    %v106 = vcvt.s32.f32 %v102
    %v107 = vcvt.s32.f32 %v103
    %v108 = vcvt.s32.f32 %v104
    %v109 = vld [vmem:[#allocation2] sm:$0xff]
    %v110 = vld [vmem:[#allocation2 + $0x8] sm:$0xff]
    %v111 = vld [vmem:[#allocation2 + $0x10] sm:$0xff]
    %v112 = vld [vmem:[#allocation2 + $0x18] sm:$0xff]
    %v113 = vld [vmem:[#allocation2 + $0x20] sm:$0xff]
    %v114 = vld [vmem:[#allocation2 + $0x28] sm:$0xff]
    %v115 = vld [vmem:[#allocation2 + $0x30] sm:$0xff]
    %v116 = vld [vmem:[#allocation2 + $0x38] sm:$0xff]
    %v117 = vld [vmem:[#allocation2 + $0x40] sm:$0xff]
    %v118 = vld [vmem:[#allocation2 + $0x48] sm:$0xff]
    %v119 = vld [vmem:[#allocation2 + $0x50] sm:$0xff]
    %v120 = vld [vmem:[#allocation2 + $0x58] sm:$0xff]
    %v121 = vld [vmem:[#allocation2 + $0x60] sm:$0xff]
    %v122 = vld [vmem:[#allocation2 + $0x68] sm:$0xff]
    %v123 = vld [vmem:[#allocation2 + $0x70] sm:$0xff]
    %v124 = vld [vmem:[#allocation2 + $0x78] sm:$0xff]
    %v125 = vld [vmem:[#allocation2 + $0x80] sm:$0xff]
    %v126 = vld [vmem:[#allocation2 + $0x88] sm:$0xff]
    %v127 = vld [vmem:[#allocation2 + $0x90] sm:$0xff]
    %v128 = vld [vmem:[#allocation2 + $0x98] sm:$0xff]
    %v129 = vld [vmem:[#allocation2 + $0xa0] sm:$0xff]
    %v130 = vld [vmem:[#allocation2 + $0xa8] sm:$0xff]
    %v131 = vld [vmem:[#allocation2 + $0xb0] sm:$0xff]
    %v132 = vld [vmem:[#allocation2 + $0xb8] sm:$0xff]
    %v133 = vld [vmem:[#allocation2 + $0xc0] sm:$0xff]
    %v134 = vld [vmem:[#allocation2 + $0xc8] sm:$0xff]
    %v135 = vld [vmem:[#allocation2 + $0xd0] sm:$0xff]
    %v136 = vld [vmem:[#allocation2 + $0xd8] sm:$0xff]
    %v137 = vld [vmem:[#allocation2 + $0xe0] sm:$0xff]
    %v138 = vld [vmem:[#allocation2 + $0xe8] sm:$0xff]
    %v139 = vld [vmem:[#allocation2 + $0xf0] sm:$0xff]
    %v140 = vld [vmem:[#allocation2 + $0xf8] sm:$0xff]
    %v141 = vld [vmem:[#allocation2 + $0x100] sm:$0xff]
    %v142 = vld [vmem:[#allocation2 + $0x108] sm:$0xff]
    %v143 = vld [vmem:[#allocation2 + $0x110] sm:$0xff]
    %v144 = vld [vmem:[#allocation2 + $0x118] sm:$0xff]
    %v145 = vld [vmem:[#allocation2 + $0x120] sm:$0xff]
    %v146 = vld [vmem:[#allocation2 + $0x128] sm:$0xff]
    %v147 = vld [vmem:[#allocation2 + $0x130] sm:$0xff]
    %v148 = vld [vmem:[#allocation2 + $0x138] sm:$0xff]
    %v149 = vld [vmem:[#allocation2 + $0x140] sm:$0xff]
    %v150 = vld [vmem:[#allocation2 + $0x148] sm:$0xff]
    %v151 = vld [vmem:[#allocation2 + $0x150] sm:$0xff]
    %v152 = vld [vmem:[#allocation2 + $0x158] sm:$0xff]
    %v153 = vld [vmem:[#allocation2 + $0x160] sm:$0xff]
    %v154 = vld [vmem:[#allocation2 + $0x168] sm:$0xff]
    %v155 = vld [vmem:[#allocation2 + $0x170] sm:$0xff]
    %v156 = vld [vmem:[#allocation2 + $0x178] sm:$0xff]
    %v157 = vld [vmem:[#allocation2 + $0x180] sm:$0xff]
    %v158 = vld [vmem:[#allocation2 + $0x188] sm:$0xff]
    %v159 = vld [vmem:[#allocation2 + $0x190] sm:$0xff]
    %v160 = vld [vmem:[#allocation2 + $0x198] sm:$0xff]
    %v161 = vld [vmem:[#allocation2 + $0x1a0] sm:$0xff]
    %v162 = vld [vmem:[#allocation2 + $0x1a8] sm:$0xff]
    %v163 = vld [vmem:[#allocation2 + $0x1b0] sm:$0xff]
    %v164 = vld [vmem:[#allocation2 + $0x1b8] sm:$0xff]
    %v165 = vld [vmem:[#allocation2 + $0x1c0] sm:$0xff]
    %v166 = vld [vmem:[#allocation2 + $0x1c8] sm:$0xff]
    %v167 = vld [vmem:[#allocation2 + $0x1d0] sm:$0xff]
    %v168 = vld [vmem:[#allocation2 + $0x1d8] sm:$0xff]
    %v169 = vld [vmem:[#allocation2 + $0x1e0] sm:$0xff]
    %v170 = vld [vmem:[#allocation2 + $0x1e8] sm:$0xff]
    %v171 = vld [vmem:[#allocation2 + $0x1f0] sm:$0xff]
    %v172 = vld [vmem:[#allocation2 + $0x1f8] sm:$0xff]
    %173 = vmatprep.subr.mxu0 0.0
    %174 = vmatpush1.msra.mxu0 %v124
    %175 = vmatprep.subr.mxu0 0.0
    %176 = vmatpush1.msra.mxu0 %v123
    %177 = vmatprep.subr.mxu0 0.0
    %178 = vmatpush1.msra.mxu0 %v122
    %179 = vmatprep.subr.mxu0 0.0
    %180 = vmatpush1.msra.mxu0 %v121
    %181 = vmatprep.subr.mxu0 0.0
    %182 = vmatpush1.msra.mxu0 %v120
    %183 = vmatprep.subr.mxu0 0.0
    %184 = vmatpush1.msra.mxu0 %v119
    %185 = vmatprep.subr.mxu0 0.0
    %186 = vmatpush1.msra.mxu0 %v118
    %187 = vmatprep.subr.mxu0 0.0
    %188 = vmatpush1.msra.mxu0 %v117
    %189 = vmatprep.subr.mxu0 0.0
    %190 = vmatpush1.msra.mxu0 %v116
    %191 = vmatprep.subr.mxu0 0.0
    %192 = vmatpush1.msra.mxu0 %v115
    %193 = vmatprep.subr.mxu0 0.0
    %194 = vmatpush1.msra.mxu0 %v114
    %195 = vmatprep.subr.mxu0 0.0
    %196 = vmatpush1.msra.mxu0 %v113
    %197 = vmatprep.subr.mxu0 0.0
    %198 = vmatpush1.msra.mxu0 %v112
    %199 = vmatprep.subr.mxu0 0.0
    %200 = vmatpush1.msra.mxu0 %v111
    %201 = vmatprep.subr.mxu0 0.0
    %202 = vmatpush1.msra.mxu0 %v110
    %203 = vmatprep.subr.mxu0 0.0
    %204 = vmatpush1.msra.mxu0 %v109
    %205 = vmatprep.subr.mxu0 0.0
    %206 = vmatpush2.msra.mxu0 %v140
    %207 = vmatprep.subr.mxu0 0.0
    %208 = vmatpush2.msra.mxu0 %v139
    %209 = vmatprep.subr.mxu0 0.0
    %210 = vmatpush2.msra.mxu0 %v138
    %211 = vmatprep.subr.mxu0 0.0
    %212 = vmatpush2.msra.mxu0 %v137
    %213 = vmatprep.subr.mxu0 0.0
    %214 = vmatpush2.msra.mxu0 %v136
    %215 = vmatprep.subr.mxu0 0.0
    %216 = vmatpush2.msra.mxu0 %v135
    %217 = vmatprep.subr.mxu0 0.0
    %218 = vmatpush2.msra.mxu0 %v134
    %219 = vmatprep.subr.mxu0 0.0
    %220 = vmatpush2.msra.mxu0 %v133
    %221 = vmatprep.subr.mxu0 0.0
    %222 = vmatpush2.msra.mxu0 %v132
    %223 = vmatprep.subr.mxu0 0.0
    %224 = vmatpush2.msra.mxu0 %v131
    %225 = vmatprep.subr.mxu0 0.0
    %226 = vmatpush2.msra.mxu0 %v130
    %227 = vmatprep.subr.mxu0 0.0
    %228 = vmatpush2.msra.mxu0 %v129
    %229 = vmatprep.subr.mxu0 0.0
    %230 = vmatpush2.msra.mxu0 %v128
    %231 = vmatprep.subr.mxu0 0.0
    %232 = vmatpush2.msra.mxu0 %v127
    %233 = vmatprep.subr.mxu0 0.0
    %234 = vmatpush2.msra.mxu0 %v126
    %235 = vmatprep.subr.mxu0 0.0
    %236 = vmatpush2.msra.mxu0 %v125
    %237 = vmatprep.mubr.f32.mxu0 %v106
    %238 = vmatmul.mubr.f32.gmra.mxu0 %v105
    %v239 = vpop.f32.mrf.mxu0
    %v240 = vadd.f32 0.0, %v239
    %v241 = vpop.f32.mrf.mxu0
    %242 = vdwg.mxu0
    %243 = vmatprep.subr.mxu0 0.0
    %244 = vmatpush1.msra.mxu0 %v156
    %245 = vmatprep.subr.mxu0 0.0
    %246 = vmatpush1.msra.mxu0 %v155
    %247 = vmatprep.subr.mxu0 0.0
    %248 = vmatpush1.msra.mxu0 %v154
    %249 = vmatprep.subr.mxu0 0.0
    %250 = vmatpush1.msra.mxu0 %v153
    %251 = vmatprep.subr.mxu0 0.0
    %252 = vmatpush1.msra.mxu0 %v152
    %253 = vmatprep.subr.mxu0 0.0
    %254 = vmatpush1.msra.mxu0 %v151
    %255 = vmatprep.subr.mxu0 0.0
    %256 = vmatpush1.msra.mxu0 %v150
    %257 = vmatprep.subr.mxu0 0.0
    %258 = vmatpush1.msra.mxu0 %v149
    %259 = vmatprep.subr.mxu0 0.0
    %260 = vmatpush1.msra.mxu0 %v148
    %261 = vmatprep.subr.mxu0 0.0
    %262 = vmatpush1.msra.mxu0 %v147
    %263 = vmatprep.subr.mxu0 0.0
    %264 = vmatpush1.msra.mxu0 %v146
    %265 = vmatprep.subr.mxu0 0.0
    %266 = vmatpush1.msra.mxu0 %v145
    %267 = vmatprep.subr.mxu0 0.0
    %268 = vmatpush1.msra.mxu0 %v144
    %269 = vmatprep.subr.mxu0 0.0
    %270 = vmatpush1.msra.mxu0 %v143
    %271 = vmatprep.subr.mxu0 0.0
    %272 = vmatpush1.msra.mxu0 %v142
    %273 = vmatprep.subr.mxu0 0.0
    %274 = vmatpush1.msra.mxu0 %v141
    %275 = vmatprep.subr.mxu0 0.0
    %276 = vmatpush2.msra.mxu0 %v172
    %277 = vmatprep.subr.mxu0 0.0
    %278 = vmatpush2.msra.mxu0 %v171
    %279 = vmatprep.subr.mxu0 0.0
    %280 = vmatpush2.msra.mxu0 %v170
    %281 = vmatprep.subr.mxu0 0.0
    %282 = vmatpush2.msra.mxu0 %v169
    %283 = vmatprep.subr.mxu0 0.0
    %284 = vmatpush2.msra.mxu0 %v168
    %285 = vmatprep.subr.mxu0 0.0
    %286 = vmatpush2.msra.mxu0 %v167
    %287 = vmatprep.subr.mxu0 0.0
    %288 = vmatpush2.msra.mxu0 %v166
    %289 = vmatprep.subr.mxu0 0.0
    %290 = vmatpush2.msra.mxu0 %v165
    %291 = vmatprep.subr.mxu0 0.0
    %292 = vmatpush2.msra.mxu0 %v164
    %293 = vmatprep.subr.mxu0 0.0
    %294 = vmatpush2.msra.mxu0 %v163
    %295 = vmatprep.subr.mxu0 0.0
    %296 = vmatpush2.msra.mxu0 %v162
    %297 = vmatprep.subr.mxu0 0.0
    %298 = vmatpush2.msra.mxu0 %v161
    %299 = vmatprep.subr.mxu0 0.0
    %300 = vmatpush2.msra.mxu0 %v160
    %301 = vmatprep.subr.mxu0 0.0
    %302 = vmatpush2.msra.mxu0 %v159
    %303 = vmatprep.subr.mxu0 0.0
    %304 = vmatpush2.msra.mxu0 %v158
    %305 = vmatprep.subr.mxu0 0.0
    %306 = vmatpush2.msra.mxu0 %v157
    %307 = vmatprep.mubr.f32.mxu0 %v108
    %308 = vmatmul.mubr.f32.gmra.mxu0 %v107
    %v309 = vpop.f32.mrf.mxu0
    %v310 = vadd.f32 %v240, %v309
    %v311 = vpop.f32.mrf.mxu0
    %312 = vdwg.mxu0
    %v313 = vmax.f32 %v310, 0.0
    %v314 = vld [vmem:[#allocation5] sm:$0xff]
    %v315 = vld [vmem:[#allocation5 + $0x8] sm:$0xff]
    %v316 = vld [vmem:[#allocation5 + $0x10] sm:$0xff]
    %v317 = vld [vmem:[#allocation5 + $0x18] sm:$0xff]
    %v318 = vld [vmem:[#allocation5 + $0x20] sm:$0xff]
    %v319 = vld [vmem:[#allocation5 + $0x28] sm:$0xff]
    %v320 = vld [vmem:[#allocation5 + $0x30] sm:$0xff]
    %v321 = vld [vmem:[#allocation5 + $0x38] sm:$0xff]
    %v322 = vld [vmem:[#allocation5 + $0x40] sm:$0xff]
    %v323 = vld [vmem:[#allocation5 + $0x48] sm:$0xff]
    %v324 = vld [vmem:[#allocation5 + $0x50] sm:$0xff]
    %v325 = vld [vmem:[#allocation5 + $0x58] sm:$0xff]
    %v326 = vld [vmem:[#allocation5 + $0x60] sm:$0xff]
    %v327 = vld [vmem:[#allocation5 + $0x68] sm:$0xff]
    %v328 = vld [vmem:[#allocation5 + $0x70] sm:$0xff]
    %v329 = vld [vmem:[#allocation5 + $0x78] sm:$0xff]
    %v330 = vld [vmem:[%s3] sm:$0x1]
    %v332 = vlaneseq
    %v333 = vshrl.u32 %v332, 7
    %v334 = vsub.s32 0, %v333
    %v335 = vrot.slane %v330, %v334
    %337 = vmatprep.subr.mxu0 0.0
    %338 = vmatpush1.msra.mxu0 %v329
    %339 = vmatprep.subr.mxu0 0.0
    %340 = vmatpush1.msra.mxu0 %v328
    %341 = vmatprep.subr.mxu0 0.0
    %342 = vmatpush1.msra.mxu0 %v327
    %343 = vmatprep.subr.mxu0 0.0
    %344 = vmatpush1.msra.mxu0 %v326
    %345 = vmatprep.subr.mxu0 0.0
    %346 = vmatpush1.msra.mxu0 %v325
    %347 = vmatprep.subr.mxu0 0.0
    %348 = vmatpush1.msra.mxu0 %v324
    %349 = vmatprep.subr.mxu0 0.0
    %350 = vmatpush1.msra.mxu0 %v323
    %351 = vmatprep.subr.mxu0 0.0
    %352 = vmatpush1.msra.mxu0 %v322
    %353 = vmatprep.subr.mxu0 0.0
    %354 = vmatpush1.msra.mxu0 %v321
    %355 = vmatprep.subr.mxu0 0.0
    %356 = vmatpush1.msra.mxu0 %v320
    %357 = vmatprep.subr.mxu0 0.0
    %358 = vmatpush1.msra.mxu0 %v319
    %359 = vmatprep.subr.mxu0 0.0
    %360 = vmatpush1.msra.mxu0 %v318
    %361 = vmatprep.subr.mxu0 0.0
    %362 = vmatpush1.msra.mxu0 %v317
    %363 = vmatprep.subr.mxu0 0.0
    %364 = vmatpush1.msra.mxu0 %v316
    %365 = vmatprep.subr.mxu0 0.0
    %366 = vmatpush1.msra.mxu0 %v315
    %367 = vmatprep.subr.mxu0 0.0
    %368 = vmatpush1.msra.mxu0 %v314
    %369 = vmatprep.subr.mxu0 0.0
    %370 = vmatpush2.msra.mxu0 0.0
    %371 = vmatprep.subr.mxu0 0.0
    %372 = vmatpush2.msra.mxu0 0.0
    %373 = vmatprep.subr.mxu0 0.0
    %374 = vmatpush2.msra.mxu0 0.0
    %375 = vmatprep.subr.mxu0 0.0
    %376 = vmatpush2.msra.mxu0 0.0
    %377 = vmatprep.subr.mxu0 0.0
    %378 = vmatpush2.msra.mxu0 0.0
    %379 = vmatprep.subr.mxu0 0.0
    %380 = vmatpush2.msra.mxu0 0.0
    %381 = vmatprep.subr.mxu0 0.0
    %382 = vmatpush2.msra.mxu0 0.0
    %383 = vmatprep.subr.mxu0 0.0
    %384 = vmatpush2.msra.mxu0 0.0
    %385 = vmatprep.subr.mxu0 0.0
    %386 = vmatpush2.msra.mxu0 0.0
    %387 = vmatprep.subr.mxu0 0.0
    %388 = vmatpush2.msra.mxu0 0.0
    %389 = vmatprep.subr.mxu0 0.0
    %390 = vmatpush2.msra.mxu0 0.0
    %391 = vmatprep.subr.mxu0 0.0
    %392 = vmatpush2.msra.mxu0 0.0
    %393 = vmatprep.subr.mxu0 0.0
    %394 = vmatpush2.msra.mxu0 0.0
    %395 = vmatprep.subr.mxu0 0.0
    %396 = vmatpush2.msra.mxu0 0.0
    %397 = vmatprep.subr.mxu0 0.0
    %398 = vmatpush2.msra.mxu0 0.0
    %399 = vmatprep.subr.mxu0 0.0
    %400 = vmatpush2.msra.mxu0 0.0
    %401 = vmatprep.mubr.f32.mxu0 0.0
    %402 = vmatmul.mubr.f32.gmra.mxu0 %v313
    %v403 = vpop.f32.mrf.mxu0
    %v404 = vadd.f32 %v335, %v403
    %v405 = vpop.f32.mrf.mxu0
    %406 = vdwg.mxu0
    %407 = vst [vmem:[#allocation7] sm:$0xff] %v404
    // Predicated region
    $region26: #{tpu_custom_call.1} parent=1 // pred_check
      _
    $region27: #{tpu_custom_call.1} parent=1 // pred_check_branch
      %409 = sbr.rel (0) target = $region29
    $region28: #{tpu_custom_call.1} parent=1 // pred_region
      %s411 = ssub.s32 128, 128
      %412 = vsyncadd [#allocation4], %s411
      %s414 = sshll.u32 [#allocation7], 4
      %s415 = int_to_ptr.vmem [resolvable:$true] %s414
      %417 = dma.vmem_to_hbm [thread:$0]  %s415, 128, %s4, [#allocation4]
    $region29: #{tpu_custom_call.1} parent=1 // pred_fallthru
      _
    // Predicated region
    $region30: #{tpu_custom_call.1} parent=1 // pred_check
      _
    $region31: #{tpu_custom_call.1} parent=1 // pred_check_branch
      %419 = sbr.rel (0) target = $region33
    $region32: #{tpu_custom_call.1} parent=1 // pred_region
      %420 = dma.done [#allocation4], 128
    $region33: #{tpu_custom_call.1} parent=1 // pred_fallthru
      _
    %421 = vsyncpa [#allocation3], 1
    %422 = vsyncpa [#allocation6], 1
    %423 = vsyncpa [#allocation4], 1

</llo_original>
